<compile_context>
chip_gen: v7x
topology: tpu7x:2x2x1
jax: 0.10.0
libtpu: 0.0.40
codegen_flags: <defaults>
</compile_context>

<pallas_src>
import functools

import jax
import jax.numpy as jnp
from jax.experimental import pallas as pl
from jax.experimental.pallas import tpu as pltpu


# ---------------------------------------------------------------------------
# Kernel: gated average-pool over the sequence axis.
# grid = (B_pad // TB, N_pad // TN); B axis "parallel", N axis "arbitrary"
# (reduction, innermost). Accumulates into a resident (TB, C) f32 scratch and
# writes the mean once per batch tile in a pl.when epilogue (lane-dense out).
# ---------------------------------------------------------------------------
def _gate_pool_kernel(img_ref, sel_ref, out_ref, acc_ref, *, inv_n):
    n_idx = pl.program_id(1)

    @pl.when(n_idx == 0)
    def _init():
        acc_ref[...] = jnp.zeros_like(acc_ref)

    img = img_ref[...]                       # (TB, TN, C) f32, streamed
    sel = sel_ref[...]                       # (TN, C)     f32, Re(select_para)
    # TODO(synk): if Mosaic materializes the (TB, TN, C) product instead of
    # fusing the multiply into the reduction, rewrite as a chunked loop; one
    # extra image-tile of VMEM headroom is reserved in the budget for it.
    acc_ref[...] += jnp.sum(img * sel[None, :, :], axis=1)   # (TB, C) running sum

    @pl.when(n_idx == pl.num_programs(1) - 1)
    def _epilogue():
        # Scale by 1/N here (mean-then-conv ordering, matches the reference).
        out_ref[...] = (acc_ref[...] * inv_n).astype(out_ref.dtype)


# ---------------------------------------------------------------------------
# Tiling / VMEM budgeting helpers.
# ---------------------------------------------------------------------------
def _round_up(x, m):
    return ((x + m - 1) // m) * m


def _vmem_capacity_bytes():
    try:
        info = pltpu.get_tpu_info()
        cap = getattr(info, "vmem_capacity_bytes", None)
        if cap:
            return int(cap)
    except Exception:
        pass
    return 64 << 20                      # conservative fallback (v7x per-TC)


def _need_bytes(tb, tn, C):
    """Scoped-VMEM footprint for one grid step (f32)."""
    itemsize = 4
    img = tb * tn * C * itemsize
    sel = tn * C * itemsize
    out = tb * C * itemsize
    acc = tb * C * itemsize
    # 2x double-buffered image + 1 image-tile headroom (see kernel TODO),
    # 2x sel, 2x out, 1x accumulator scratch.
    return 3 * img + 2 * sel + 2 * out + acc


def _pick_tiles(B, N, C, budget):
    """Pick (TB, TN). Prefer full-N tiles (contiguous per-row DMA), then grow
    TB within the budget; keep >=2 batch tiles when B > 8 so megacore/parallel
    sharding has work on both TensorCores."""
    tb_min = B if B <= 8 else 8

    if _need_bytes(tb_min, N, C) <= budget:
        tn = N
        if B <= 8:
            tb = B
        else:
            tb_cap = min(_round_up(-(-B // 2), 8), _round_up(B, 8))
            denom = 4 * C * (3 * tn + 3)
            tb_fit = (budget - 2 * 4 * tn * C) // max(denom, 1)
            tb = max(min((tb_fit // 8) * 8, tb_cap), 8)
        return tb, tn

    # Full-N tile doesn't fit even at minimal TB: shrink TN (multiple of 8).
    tb = tb_min
    denom = 4 * C * (3 * tb + 2)
    tn_fit = (budget - 3 * 4 * tb * C) // max(denom, 1)
    tn = max((tn_fit // 8) * 8, 8)
    tn = min(tn, _round_up(N, 8))
    return tb, tn


def _gated_avg_pool_pallas(image, sel_real, *, tb=None, tn=None):
    """Returns pooled = mean_t(image[:, t, :] * sel_real[t, :]) of shape (B, C)."""
    B, N, C = image.shape

    cap = _vmem_capacity_bytes()
    budget = min(3 * cap // 4, 96 << 20)     # ~48 MiB on v7x, ~96 MiB on v5e/v6e

    dtb, dtn = _pick_tiles(B, N, C, budget)
    tb = dtb if tb is None else tb
    tn = dtn if tn is None else tn

    # Enforce (8,128)-legality on tiled axes: tile is full-dim or multiple of 8.
    if tb >= B:
        tb = B
    else:
        tb = max((tb // 8) * 8, 8)
        tb = min(tb, _round_up(B, 8))
        if tb >= B:
            tb = B
    if tn >= N:
        tn = N
    else:
        tn = max((tn // 8) * 8, 8)
        if tn >= N:
            tn = N

    B_pad = _round_up(B, tb)
    N_pad = _round_up(N, tn)
    if B_pad != B or N_pad != N:
        # Zero padding is exact: padded rows contribute 0 to the sum and the
        # 1/N scale uses the true N; padded batch rows are sliced off below.
        image = jnp.pad(image, ((0, B_pad - B), (0, N_pad - N), (0, 0)))
    if N_pad != N:
        sel_real = jnp.pad(sel_real, ((0, N_pad - N), (0, 0)))

    grid = (B_pad // tb, N_pad // tn)

    need = _need_bytes(tb, tn, C)
    vmem_limit = int(min(max(need + (2 << 20), 16 << 20), (cap * 9) // 10))

    kernel = functools.partial(_gate_pool_kernel, inv_n=1.0 / N)

    pooled = pl.pallas_call(
        kernel,
        out_shape=jax.ShapeDtypeStruct((B_pad, C), jnp.float32),
        grid_spec=pltpu.PrefetchScalarGridSpec(
            num_scalar_prefetch=0,
            grid=grid,
            in_specs=[
                pl.BlockSpec((tb, tn, C), lambda b, n: (b, n, 0)),   # image: streamed
                pl.BlockSpec((tn, C), lambda b, n: (n, 0)),          # gate: per N tile
            ],
            out_specs=pl.BlockSpec((tb, C), lambda b, n: (b, 0)),    # lane-dense (TB, C)
            scratch_shapes=[pltpu.VMEM((tb, C), jnp.float32)],       # pooled-sum acc
        ),
        compiler_params=pltpu.CompilerParams(
            dimension_semantics=("parallel", "arbitrary"),
            vmem_limit_bytes=vmem_limit,
        ),
    )(image, sel_real)

    return pooled[:B]


# ---------------------------------------------------------------------------
# Public wrapper: full Image2TextGate forward.
# ---------------------------------------------------------------------------
def image2text_gate(image, select_para, conv_w, conv_b, *, tb=None, tn=None,
                    use_pallas=None):
    """image: (B, N, C) f32; select_para: (N, C, 2); conv_w: (C, C, 1); conv_b: (C,)."""
    B, N, C = image.shape
    assert select_para.shape == (N, C, 2)

    image = image.astype(jnp.float32)
    # Real part of the complex gate (image is real; only `.real` is pooled).
    sel_real = select_para[..., 0].astype(jnp.float32)
    # Conv1d(k=1) weight, pre-transposed to (C_in, C_out).
    w2d = conv_w[:, :, 0].astype(jnp.float32).T
    b_row = conv_b.reshape(1, C).astype(jnp.float32)

    if use_pallas is None:
        # Tiny problems are launch-overhead bound: let XLA handle them.
        use_pallas = (B * N * C * 4) >= (1 << 20)

    if use_pallas:
        pooled = _gated_avg_pool_pallas(image, sel_real, tb=tb, tn=tn)
    else:
        pooled = jnp.mean(image * sel_real[None, :, :], axis=1)

    # 1x1 conv + bias: tiny (B, C) @ (C, C) matmul, hoisted out of the kernel
    # so no (C, C) weight lives in VMEM (full-batch MXU utilization in XLA).
    out = jnp.dot(pooled, w2d, preferred_element_type=jnp.float32) + b_row
    return out.reshape(B, 1, C)


# ---------------------------------------------------------------------------
# Pure-JAX reference mirroring the PyTorch forward.
# ---------------------------------------------------------------------------
def _reference(image, select_para, conv_w, conv_b):
    gated_real = image * select_para[..., 0]               # real(x * complex gate)
    pooled = jnp.mean(gated_real, axis=1)                  # AvgPool1d(kernel=N)
    out = pooled @ conv_w[:, :, 0].T + conv_b              # Conv1d k=1 + bias
    return out[:, None, :]


if __name__ == "__main__":
    def run_case(key, B, N, C, **kwargs):
        k_img, k_sel, k_w, k_b = jax.random.split(key, 4)
        image = jax.random.normal(k_img, (B, N, C), dtype=jnp.float32)
        select_para = jax.random.normal(k_sel, (N, C, 2), dtype=jnp.float32)
        bound = 1.0 / (C ** 0.5)
        conv_w = jax.random.uniform(k_w, (C, C, 1), jnp.float32, -bound, bound)
        conv_b = jax.random.uniform(k_b, (C,), jnp.float32, -bound, bound)

        out = image2text_gate(image, select_para, conv_w, conv_b, **kwargs)
        out = jax.block_until_ready(out)

        ref = _reference(image, select_para, conv_w, conv_b)
        assert out.shape == (B, 1, C), out.shape
        assert jnp.allclose(out, ref, atol=1e-4, rtol=1e-4), \
            f"mismatch B={B} N={N} C={C}"

    key = jax.random.PRNGKey(0)
    k1, k2, k3 = jax.random.split(key, 3)

    # Primary module-like shapes: batch=2, n=8, d_model=32. Force the Pallas
    # path (the auto-dispatcher would send this tiny case to plain XLA).
    run_case(k1, 2, 8, 32, use_pallas=True)

    # Multi-tile grid with B and N padding: grid = (2, 3) after padding to
    # (16, 24); exercises N-axis accumulation + pl.when epilogue.
    run_case(k2, 10, 20, 128, tb=8, tn=8, use_pallas=True)

    # Auto-picked tiles: full-N tile, batch split into 2 "parallel" tiles
    # (megacore-shardable), auto dispatch chooses the Pallas path.
    run_case(k3, 16, 64, 256)

    print("KERNEL_OK")
</pallas_src>

<mosaic_0001>
module attributes {stable_mosaic.version = 11 : i64} {
  func.func @_gate_pool_kernel(%arg0: i32, %arg1: i32, %arg2: memref<2x8x32xf32, #tpu.memory_space<vmem>>, %arg3: memref<8x32xf32, #tpu.memory_space<vmem>>, %arg4: memref<2x32xf32, #tpu.memory_space<vmem>>, %arg5: memref<2x32xf32, #tpu.memory_space<vmem>>) attributes {dimension_semantics = [#tpu.dimension_semantics<parallel>, #tpu.dimension_semantics<arbitrary>], iteration_bounds = array<i64: 1, 1>, scalar_prefetch = 0 : i64, scratch_operands = 1 : i64, tpu.core_type = #tpu.core_type<tc>, window_params = [{transform_indices = @transform_0, window_bounds = array<i64: 2, 8, 32>}, {transform_indices = @transform_1, window_bounds = array<i64: 8, 32>}, {transform_indices = @transform_2, window_bounds = array<i64: 2, 32>}]} {
    %c0_i32 = arith.constant 0 : i32
    %0 = arith.cmpi eq, %arg1, %c0_i32 : i32
    %1 = arith.extui %0 : i1 to i32
    %c0_i32_0 = arith.constant 0 : i32
    %2 = arith.cmpi ne, %1, %c0_i32_0 : i32
    scf.if %2 {
      %cst_11 = arith.constant 0.000000e+00 : f32
      %15 = vector.broadcast %cst_11 : f32 to vector<2x32xf32>
      %c0_12 = arith.constant 0 : index
      %c0_13 = arith.constant 0 : index
      %16 = vector.load %arg5[%c0_12, %c0_13] : memref<2x32xf32, #tpu.memory_space<vmem>>, vector<2x32xf32>
      tpu.vector_store %arg5[%c0_12, %c0_13], %15 {strides = array<i32>} : memref<2x32xf32, #tpu.memory_space<vmem>>, vector<2x32xf32>,
    } else {
    }
    %c0 = arith.constant 0 : index
    %c0_1 = arith.constant 0 : index
    %c0_2 = arith.constant 0 : index
    %3 = vector.load %arg2[%c0, %c0_1, %c0_2] : memref<2x8x32xf32, #tpu.memory_space<vmem>>, vector<2x8x32xf32>
    %c0_3 = arith.constant 0 : index
    %c0_4 = arith.constant 0 : index
    %4 = vector.load %arg3[%c0_3, %c0_4] : memref<8x32xf32, #tpu.memory_space<vmem>>, vector<8x32xf32>
    %c0_5 = arith.constant 0 : index
    %c0_6 = arith.constant 0 : index
    %5 = vector.load %arg5[%c0_5, %c0_6] : memref<2x32xf32, #tpu.memory_space<vmem>>, vector<2x32xf32>
    %6 = vector.shape_cast %4 : vector<8x32xf32> to vector<1x8x32xf32>
    %7 = vector.broadcast %6 : vector<1x8x32xf32> to vector<2x8x32xf32>
    %8 = arith.mulf %3, %7 : vector<2x8x32xf32>
    %cst = arith.constant dense<0.000000e+00> : vector<2x32xf32>
    %9 = vector.multi_reduction <add>, %8, %cst [1] : vector<2x8x32xf32> to vector<2x32xf32>
    %10 = arith.addf %5, %9 : vector<2x32xf32>
    %c0_7 = arith.constant 0 : index
    %c0_8 = arith.constant 0 : index
    %11 = vector.load %arg5[%c0_7, %c0_8] : memref<2x32xf32, #tpu.memory_space<vmem>>, vector<2x32xf32>
    tpu.vector_store %arg5[%c0_7, %c0_8], %10 {strides = array<i32>} : memref<2x32xf32, #tpu.memory_space<vmem>>, vector<2x32xf32>,
    %c0_i32_9 = arith.constant 0 : i32
    %12 = arith.cmpi eq, %arg1, %c0_i32_9 : i32
    %13 = arith.extui %12 : i1 to i32
    %c0_i32_10 = arith.constant 0 : i32
    %14 = arith.cmpi ne, %13, %c0_i32_10 : i32
    scf.if %14 {
      %c0_11 = arith.constant 0 : index
      %c0_12 = arith.constant 0 : index
      %15 = vector.load %arg5[%c0_11, %c0_12] : memref<2x32xf32, #tpu.memory_space<vmem>>, vector<2x32xf32>
      %cst_13 = arith.constant 1.250000e-01 : f32
      %16 = vector.broadcast %cst_13 : f32 to vector<2x32xf32>
      %17 = arith.mulf %15, %16 : vector<2x32xf32>
      %c0_14 = arith.constant 0 : index
      %c0_15 = arith.constant 0 : index
      %18 = vector.load %arg4[%c0_14, %c0_15] : memref<2x32xf32, #tpu.memory_space<vmem>>, vector<2x32xf32>
      tpu.vector_store %arg4[%c0_14, %c0_15], %17 {strides = array<i32>} : memref<2x32xf32, #tpu.memory_space<vmem>>, vector<2x32xf32>,
    } else {
    }
    return
  }
  func.func @transform_0(%arg0: i32, %arg1: i32) -> (i32, i32, i32) {
    %c0_i32 = arith.constant 0 : i32
    %c0_i32_0 = arith.constant 0 : i32
    return %arg0, %arg1, %c0_i32 : i32, i32, i32
  }
  func.func @transform_1(%arg0: i32, %arg1: i32) -> (i32, i32) {
    %c0_i32 = arith.constant 0 : i32
    %c0_i32_0 = arith.constant 0 : i32
    return %arg1, %c0_i32 : i32, i32
  }
  func.func @transform_2(%arg0: i32, %arg1: i32) -> (i32, i32) {
    %c0_i32 = arith.constant 0 : i32
    %c0_i32_0 = arith.constant 0 : i32
    return %arg0, %c0_i32 : i32, i32
  }
}

</mosaic_0001>

<llo_original>
// kernel: tpu_custom_call.1
$region0: #{tpu_custom_call.1}
  #allocation0 [shape = 'u32[]', space=smem, size = 0x4, offset = 0x4, fixed_abs, tag = 'smem constant byte address 0x4 - core index']
  #allocation1 [shape = 'u32[144,128]{1,0:T(1,128)}', space=vmem, size = 0x12000, scoped, tag = 'internal scratch']
  #allocation2 [shape = 'f32[2,32]{1,0:T(2,128)}', space=vmem, size = 0x400, scoped, tag = 'scratch operand']
  %s0 = inlined_call_operand.hbm [shape: f32[2,8,32], index: 0, kind: input, shape index: {}]
  %s1 = inlined_call_operand.hbm [shape: f32[8,32], index: 1, kind: input, shape index: {}]
  %s2 = inlined_call_operand.hbm [shape: f32[2,32], index: 2, kind: output, shape index: {}]
  %s3 = sld [smem:[#allocation0]]
  $region34: #{tpu_custom_call.1} parent=0
    _
  %s5 = ssub.s32 1, %s3
  %s6 = scalar_select 0, %s5, %s3
  $region1: #{tpu_custom_call.1} parent=0
    #allocation3 [shape = 'u8[8192]{0}', space=vmem, size = 0x2000, scoped, tag = 'input window, operand 0, single buffered']
    #allocation4 [shape = 's32[1]{0}', space=sflag, size = 0x4, scoped, tag = 'scoped memory for tpu_custom_call.1']
    #allocation5 [shape = 's32[1]{0}', space=sflag, size = 0x4, scoped, tag = 'scoped memory for tpu_custom_call.1']
    #allocation6 [shape = 'u8[4096]{0}', space=vmem, size = 0x1000, scoped, tag = 'input window, operand 1, single buffered']
    #allocation7 [shape = 's32[1]{0}', space=sflag, size = 0x4, scoped, tag = 'scoped memory for tpu_custom_call.1']
    #allocation8 [shape = 'u8[1024]{0}', space=vmem, size = 0x400, scoped, tag = 'output window, operand 0, single buffered']
    %7 = vsyncpa [#allocation4], 0
    %8 = vsyncpa [#allocation7], 0
    %9 = vsyncpa [#allocation5], 0
    // Predicated region
    $region2: #{tpu_custom_call.1} parent=1 // pred_check
      _
    $region3: #{tpu_custom_call.1} parent=1 // pred_check_branch
      %11 = sbr.rel (0) target = $region5
    $region4: #{tpu_custom_call.1} parent=1 // pred_region
      %s13 = ssub.s32 256, 256
      %14 = vsyncadd [#allocation4], %s13
      %s15 = sshll.u32 [#allocation3], 4
      %s16 = int_to_ptr.vmem [resolvable:$true] %s15
      %21 = dma.hbm_to_vmem [thread:$0]  %s0, 256, %s16, [#allocation4], 128, 128, 8
    $region5: #{tpu_custom_call.1} parent=1 // pred_fallthru
      _
    // Predicated region
    $region6: #{tpu_custom_call.1} parent=1 // pred_check
      _
    $region7: #{tpu_custom_call.1} parent=1 // pred_check_branch
      %23 = sbr.rel (0) target = $region9
    $region8: #{tpu_custom_call.1} parent=1 // pred_region
      %s25 = ssub.s32 128, 128
      %26 = vsyncadd [#allocation7], %s25
      %s28 = sshll.u32 [#allocation6], 4
      %s29 = int_to_ptr.vmem [resolvable:$true] %s28
      %31 = dma.hbm_to_vmem [thread:$0]  %s1, 128, %s29, [#allocation7]
    $region9: #{tpu_custom_call.1} parent=1 // pred_fallthru
      _
    // Predicated region
    $region10: #{tpu_custom_call.1} parent=1 // pred_check
      _
    $region11: #{tpu_custom_call.1} parent=1 // pred_check_branch
      %33 = sbr.rel (0) target = $region13
    $region12: #{tpu_custom_call.1} parent=1 // pred_region
      %34 = dma.done [#allocation4], 256
    $region13: #{tpu_custom_call.1} parent=1 // pred_fallthru
      _
    // Predicated region
    $region14: #{tpu_custom_call.1} parent=1 // pred_check
      _
    $region15: #{tpu_custom_call.1} parent=1 // pred_check_branch
      %36 = sbr.rel (0) target = $region17
    $region16: #{tpu_custom_call.1} parent=1 // pred_region
      %37 = dma.done [#allocation7], 128
    $region17: #{tpu_custom_call.1} parent=1 // pred_fallthru
      _
    %p38 = scmp.eq.s32.totalorder 0, 0
    // Predicated region
    $region18: #{tpu_custom_call.1} parent=1 // pred_check
      %p39 = pneg %p38
    $region19: #{tpu_custom_call.1} parent=1 // pred_check_branch
      %41 = sbr.rel (%p39) target = $region21
    $region20: #{tpu_custom_call.1} parent=1 // pred_region
      %vm42 = vcmask 254976
      %43 = vst.msk [vmem:[#allocation2] sm:$0x3] %vm42, 0.0
    $region21: #{tpu_custom_call.1} parent=1 // pred_fallthru
      _
    %v44 = vld [vmem:[#allocation3] sm:$0xff]
    %v45 = vld [vmem:[#allocation3 + $0x8] sm:$0xff]
    %v46 = vld [vmem:[#allocation6] sm:$0xff]
    %v47 = vld [vmem:[#allocation2] sm:$0x3]
    %v48 = vmul.f32 %v44, %v46
    %v49 = vmul.f32 %v45, %v46
    %vm50 = vcmask 261120
    %v51 = vsel %vm50, %v48, 0.0
    %v52 = vrot.slane %v51, 4
    %v53 = vadd.f32 %v51, %v52
    %v54 = vrot.slane %v53, 2
    %v55 = vadd.f32 %v53, %v54
    %v56 = vrot.slane %v55, 1
    %v57 = vadd.f32 %v55, %v56
    %v58 = vsel %vm50, %v49, 0.0
    %v59 = vrot.slane %v58, 4
    %v60 = vadd.f32 %v58, %v59
    %v61 = vrot.slane %v60, 2
    %v62 = vadd.f32 %v60, %v61
    %v63 = vrot.slane %v62, 1
    %v64 = vadd.f32 %v62, %v63
    %vm67 = vcmask 1041409
    %v68 = vsel %vm67, %v64, %v57
    %v70 = vadd.f32 %v47, %v68
    %vm71 = vcmask 254976
    %72 = vst.msk [vmem:[#allocation2] sm:$0x3] %vm71, %v70
    // Predicated region
    $region22: #{tpu_custom_call.1} parent=1 // pred_check
      %p73 = pneg %p38
    $region23: #{tpu_custom_call.1} parent=1 // pred_check_branch
      %75 = sbr.rel (%p73) target = $region25
    $region24: #{tpu_custom_call.1} parent=1 // pred_region
      %v76 = vld [vmem:[#allocation2] sm:$0x3]
      %v77 = vmul.f32 %v76, 0.125
      %78 = vst.msk [vmem:[#allocation8] sm:$0x3] %vm71, %v77
    $region25: #{tpu_custom_call.1} parent=1 // pred_fallthru
      _
    // Predicated region
    $region26: #{tpu_custom_call.1} parent=1 // pred_check
      _
    $region27: #{tpu_custom_call.1} parent=1 // pred_check_branch
      %80 = sbr.rel (0) target = $region29
    $region28: #{tpu_custom_call.1} parent=1 // pred_region
      %s82 = ssub.s32 32, 32
      %83 = vsyncadd [#allocation5], %s82
      %s85 = sshll.u32 [#allocation8], 4
      %s86 = int_to_ptr.vmem [resolvable:$true] %s85
      %88 = dma.vmem_to_hbm [thread:$0]  %s86, 32, %s2, [#allocation5]
    $region29: #{tpu_custom_call.1} parent=1 // pred_fallthru
      _
    // Predicated region
    $region30: #{tpu_custom_call.1} parent=1 // pred_check
      _
    $region31: #{tpu_custom_call.1} parent=1 // pred_check_branch
      %90 = sbr.rel (0) target = $region33
    $region32: #{tpu_custom_call.1} parent=1 // pred_region
      %91 = dma.done [#allocation5], 32
    $region33: #{tpu_custom_call.1} parent=1 // pred_fallthru
      _
    %92 = vsyncpa [#allocation4], 1
    %93 = vsyncpa [#allocation7], 1
    %94 = vsyncpa [#allocation5], 1

</llo_original>
